<compile_context>
chip_gen: v7x
topology: tpu7x:2x2x1
jax: 0.10.0
libtpu: 0.0.40
codegen_flags: <defaults>
</compile_context>

<pallas_src>
import math

import jax
import jax.numpy as jnp
from jax import lax
from jax.experimental import pallas as pl
from jax.experimental.pallas import tpu as pltpu


OUT_PAD = 128          # lane-dense fc2 output width (real logits = first 2)
_INV_SQRT2 = 1.0 / math.sqrt(2.0)


def ffn_projection_kernel(x_ref, w1_ref, b1_ref, gamma_ref, beta_ref,
                          w2_ref, b2_ref, o_ref):
    """fc1 (bf16 x f32acc) + erf-gelu + LayerNorm + fc2, one batch tile."""
    H = x_ref.shape[-1]

    # fc1: [TB, H] @ [H, H] -> f32 accumulator. Operands in bf16 for MXU
    # throughput / DMA; bias add and everything downstream in f32.
    h = jnp.dot(x_ref[...].astype(jnp.bfloat16), w1_ref[...],
                preferred_element_type=jnp.float32)
    h = h + b1_ref[...]

    # gelu (exact erf form, matching the PyTorch reference `gelu`)
    h = h * 0.5 * (1.0 + lax.erf(h * _INV_SQRT2))

    # LayerNorm over hidden dim, single-pass stats (E[x^2] - E[x]^2),
    # biased variance, eps=1e-5 inside rsqrt (PyTorch defaults).
    inv_h = 1.0 / H
    s1 = jnp.sum(h, axis=-1, keepdims=True)
    s2 = jnp.sum(h * h, axis=-1, keepdims=True)
    mean = s1 * inv_h
    var = s2 * inv_h - mean * mean
    h = (h - mean) * lax.rsqrt(var + 1e-5)
    h = h * gamma_ref[...] + beta_ref[...]

    # fc2: [TB, H] @ [H, OUT_PAD] (zero-padded columns) -> lane-dense store.
    o_ref[...] = (jnp.dot(h.astype(jnp.bfloat16), w2_ref[...],
                          preferred_element_type=jnp.float32)
                  + b2_ref[...])


def ffn_projection(cls_output, w1, b1, gamma, beta, w2, b2, *, tb=128):
    """Pallas wrapper: batch grid, weights resident, padded lane-dense output.

    cls_output: [B, H] f32
    w1: [H, H] bf16, b1/gamma/beta: [1, H] f32
    w2: [H, 2] bf16, b2: [1, 2] f32
    returns [B, 2] f32
    """
    B, H = cls_output.shape
    out_dim = w2.shape[1]

    # Batch tile: multiple of 8 sublanes, no bigger than (padded) B.
    tb = max(8, min(tb, ((B + 7) // 8) * 8))
    b_pad = ((B + tb - 1) // tb) * tb
    if b_pad != B:
        cls_output = jnp.pad(cls_output, ((0, b_pad - B), (0, 0)))
    nb = b_pad // tb

    # Lane-dense fc2: zero-pad the (tiny) output dimension to 128.
    w2_p = jnp.pad(w2, ((0, 0), (0, OUT_PAD - out_dim)))
    b2_p = jnp.pad(b2, ((0, 0), (0, OUT_PAD - out_dim)))

    # VMEM budget: resident weights + double-buffered activation tiles.
    w_bytes = H * H * 2 + H * OUT_PAD * 2 + 3 * H * 4 + OUT_PAD * 4
    act_bytes = 2 * (tb * H * 4 + tb * OUT_PAD * 4)
    vmem_limit = int(min(100 * 2**20, max(16 * 2**20, 2 * (w_bytes + act_bytes))))

    batch_spec = lambda shape: pl.BlockSpec(shape, lambda i: (0, 0))

    out_padded = pl.pallas_call(
        ffn_projection_kernel,
        out_shape=jax.ShapeDtypeStruct((b_pad, OUT_PAD), jnp.float32),
        grid=(nb,),
        in_specs=[
            pl.BlockSpec((tb, H), lambda i: (i, 0)),   # cls tile
            batch_spec((H, H)),                        # W1 (resident)
            batch_spec((1, H)),                        # b1
            batch_spec((1, H)),                        # ln gamma
            batch_spec((1, H)),                        # ln beta
            batch_spec((H, OUT_PAD)),                  # W2 (padded, resident)
            batch_spec((1, OUT_PAD)),                  # b2 (padded)
        ],
        out_specs=pl.BlockSpec((tb, OUT_PAD), lambda i: (i, 0)),
        compiler_params=pltpu.CompilerParams(
            dimension_semantics=("parallel",),
            vmem_limit_bytes=vmem_limit),
    )(cls_output, w1, b1, gamma, beta, w2_p, b2_p)

    return out_padded[:B, :out_dim]


def retrieve_model_forward(data, params):
    """RetrieveModel.forward: bert(...)[0][:, 0, :] -> FFNLayer projection."""
    input_ids = data["input_ids"]          # [B, S] int32
    _ = data["input_mask"]                 # stub BERT ignores the mask
    # BERT stub: CLS-only embedding gather (position 0) — never materializes
    # the full [B, S, H] hidden tensor.
    cls_output = params["word_embeddings"][input_ids[:, 0]]   # [B, H] f32
    return ffn_projection(
        cls_output,
        params["fc1_w"], params["fc1_b"],
        params["ln_gamma"], params["ln_beta"],
        params["fc2_w"], params["fc2_b"],
    )


def init_params(key, vocab_size, hidden_size, out_dim=2):
    ks = jax.random.split(key, 5)
    scale = 0.02
    return {
        "word_embeddings": scale * jax.random.normal(
            ks[0], (vocab_size, hidden_size), jnp.float32),
        # Linear weights stored [in, out] (== PyTorch weight.T), bf16 for DMA/MXU.
        "fc1_w": (scale * jax.random.normal(
            ks[1], (hidden_size, hidden_size), jnp.float32)).astype(jnp.bfloat16),
        "fc1_b": jnp.zeros((1, hidden_size), jnp.float32),
        "ln_gamma": jnp.ones((1, hidden_size), jnp.float32),
        "ln_beta": jnp.zeros((1, hidden_size), jnp.float32),
        "fc2_w": (scale * jax.random.normal(
            ks[2], (hidden_size, out_dim), jnp.float32)).astype(jnp.bfloat16),
        "fc2_b": jnp.zeros((1, out_dim), jnp.float32),
    }


if __name__ == "__main__":
    B, S, H, VOCAB = 16, 8, 128, 64

    key = jax.random.PRNGKey(0)
    k_params, k_ids = jax.random.split(key)
    params = init_params(k_params, VOCAB, H)

    input_ids = jax.random.randint(k_ids, (B, S), 0, VOCAB, dtype=jnp.int32)
    input_mask = jnp.ones((B, S), jnp.int32)
    data = {"input_ids": input_ids, "input_mask": input_mask}

    logits = retrieve_model_forward(data, params)
    jax.block_until_ready(logits)

    # Pure-JAX reference of the projection head, mirroring the kernel's
    # bf16-operand / f32-accumulation matmuls so tolerances stay tight.
    cls = params["word_embeddings"][input_ids[:, 0]]
    h = jnp.dot(cls.astype(jnp.bfloat16), params["fc1_w"],
                preferred_element_type=jnp.float32) + params["fc1_b"]
    h = h * 0.5 * (1.0 + lax.erf(h / math.sqrt(2.0)))
    mu = h.mean(-1, keepdims=True)
    var = ((h - mu) ** 2).mean(-1, keepdims=True)
    h = (h - mu) / jnp.sqrt(var + 1e-5) * params["ln_gamma"] + params["ln_beta"]
    ref = jnp.dot(h.astype(jnp.bfloat16), params["fc2_w"],
                  preferred_element_type=jnp.float32) + params["fc2_b"]

    assert logits.shape == (B, 2)
    assert jnp.allclose(logits, ref, atol=2e-3, rtol=2e-3), (
        float(jnp.max(jnp.abs(logits - ref))))

    print("KERNEL_OK")
</pallas_src>

<mosaic_0001>
module attributes {stable_mosaic.version = 11 : i64} {
  func.func @ffn_projection_kernel(%arg0: i32, %arg1: memref<16x128xf32, #tpu.memory_space<vmem>>, %arg2: memref<128x128xbf16, #tpu.memory_space<vmem>>, %arg3: memref<1x128xf32, #tpu.memory_space<vmem>>, %arg4: memref<1x128xf32, #tpu.memory_space<vmem>>, %arg5: memref<1x128xf32, #tpu.memory_space<vmem>>, %arg6: memref<128x128xbf16, #tpu.memory_space<vmem>>, %arg7: memref<1x128xf32, #tpu.memory_space<vmem>>, %arg8: memref<16x128xf32, #tpu.memory_space<vmem>>) attributes {dimension_semantics = [#tpu.dimension_semantics<parallel>], iteration_bounds = array<i64: 1>, scalar_prefetch = 0 : i64, scratch_operands = 0 : i64, tpu.core_type = #tpu.core_type<tc>, window_params = [{transform_indices = @transform_0, window_bounds = array<i64: 16, 128>}, {pipeline_mode = #tpu.pipeline_mode<synchronous>, transform_indices = @transform_1, window_bounds = array<i64: 128, 128>}, {pipeline_mode = #tpu.pipeline_mode<synchronous>, transform_indices = @transform_2, window_bounds = array<i64: 1, 128>}, {pipeline_mode = #tpu.pipeline_mode<synchronous>, transform_indices = @transform_3, window_bounds = array<i64: 1, 128>}, {pipeline_mode = #tpu.pipeline_mode<synchronous>, transform_indices = @transform_4, window_bounds = array<i64: 1, 128>}, {pipeline_mode = #tpu.pipeline_mode<synchronous>, transform_indices = @transform_5, window_bounds = array<i64: 128, 128>}, {pipeline_mode = #tpu.pipeline_mode<synchronous>, transform_indices = @transform_6, window_bounds = array<i64: 1, 128>}, {transform_indices = @transform_7, window_bounds = array<i64: 16, 128>}]} {
    %c0 = arith.constant 0 : index
    %c0_0 = arith.constant 0 : index
    %0 = vector.load %arg1[%c0, %c0_0] : memref<16x128xf32, #tpu.memory_space<vmem>>, vector<16x128xf32>
    %1 = arith.truncf %0 : vector<16x128xf32> to vector<16x128xbf16>
    %c0_1 = arith.constant 0 : index
    %c0_2 = arith.constant 0 : index
    %2 = vector.load %arg2[%c0_1, %c0_2] : memref<128x128xbf16, #tpu.memory_space<vmem>>, vector<128x128xbf16>
    %cst = arith.constant dense<0.000000e+00> : vector<16x128xf32>
    %3 = tpu.matmul %1, %2, %cst {dimension_numbers = #tpu.dot_dimension_numbers<[1], [0], [0], [1], [0, 0, 1, 1], [], []>} : vector<16x128xbf16>, vector<128x128xbf16>, vector<16x128xf32> -> vector<16x128xf32>
    %c0_3 = arith.constant 0 : index
    %c0_4 = arith.constant 0 : index
    %4 = vector.load %arg3[%c0_3, %c0_4] : memref<1x128xf32, #tpu.memory_space<vmem>>, vector<1x128xf32>
    %5 = vector.broadcast %4 : vector<1x128xf32> to vector<16x128xf32>
    %6 = arith.addf %3, %5 : vector<16x128xf32>
    %cst_5 = arith.constant 5.000000e-01 : f32
    %7 = vector.broadcast %cst_5 : f32 to vector<16x128xf32>
    %8 = arith.mulf %6, %7 : vector<16x128xf32>
    %cst_6 = arith.constant 0.707106769 : f32
    %9 = vector.broadcast %cst_6 : f32 to vector<16x128xf32>
    %10 = arith.mulf %6, %9 : vector<16x128xf32>
    %11 = math.erf %10 : vector<16x128xf32>
    %cst_7 = arith.constant 1.000000e+00 : f32
    %12 = vector.broadcast %cst_7 : f32 to vector<16x128xf32>
    %13 = arith.addf %12, %11 : vector<16x128xf32>
    %14 = arith.mulf %8, %13 : vector<16x128xf32>
    %cst_8 = arith.constant dense<0.000000e+00> : vector<16xf32>
    %15 = vector.multi_reduction <add>, %14, %cst_8 [1] : vector<16x128xf32> to vector<16xf32>
    %16 = vector.shape_cast %15 : vector<16xf32> to vector<16x1xf32>
    %17 = arith.mulf %14, %14 : vector<16x128xf32>
    %cst_9 = arith.constant dense<0.000000e+00> : vector<16xf32>
    %18 = vector.multi_reduction <add>, %17, %cst_9 [1] : vector<16x128xf32> to vector<16xf32>
    %19 = vector.shape_cast %18 : vector<16xf32> to vector<16x1xf32>
    %cst_10 = arith.constant 7.812500e-03 : f32
    %20 = vector.broadcast %cst_10 : f32 to vector<16x1xf32>
    %21 = arith.mulf %16, %20 : vector<16x1xf32>
    %cst_11 = arith.constant 7.812500e-03 : f32
    %22 = vector.broadcast %cst_11 : f32 to vector<16x1xf32>
    %23 = arith.mulf %19, %22 : vector<16x1xf32>
    %24 = arith.mulf %21, %21 : vector<16x1xf32>
    %25 = arith.subf %23, %24 : vector<16x1xf32>
    %26 = vector.broadcast %21 : vector<16x1xf32> to vector<16x128xf32>
    %27 = arith.subf %14, %26 : vector<16x128xf32>
    %cst_12 = arith.constant 9.99999974E-6 : f32
    %28 = vector.broadcast %cst_12 : f32 to vector<16x1xf32>
    %29 = arith.addf %25, %28 : vector<16x1xf32>
    %30 = math.rsqrt %29 : vector<16x1xf32>
    %31 = vector.broadcast %30 : vector<16x1xf32> to vector<16x128xf32>
    %32 = arith.mulf %27, %31 : vector<16x128xf32>
    %c0_13 = arith.constant 0 : index
    %c0_14 = arith.constant 0 : index
    %33 = vector.load %arg4[%c0_13, %c0_14] : memref<1x128xf32, #tpu.memory_space<vmem>>, vector<1x128xf32>
    %34 = vector.broadcast %33 : vector<1x128xf32> to vector<16x128xf32>
    %35 = arith.mulf %32, %34 : vector<16x128xf32>
    %c0_15 = arith.constant 0 : index
    %c0_16 = arith.constant 0 : index
    %36 = vector.load %arg5[%c0_15, %c0_16] : memref<1x128xf32, #tpu.memory_space<vmem>>, vector<1x128xf32>
    %37 = vector.broadcast %36 : vector<1x128xf32> to vector<16x128xf32>
    %38 = arith.addf %35, %37 : vector<16x128xf32>
    %39 = arith.truncf %38 : vector<16x128xf32> to vector<16x128xbf16>
    %c0_17 = arith.constant 0 : index
    %c0_18 = arith.constant 0 : index
    %40 = vector.load %arg6[%c0_17, %c0_18] : memref<128x128xbf16, #tpu.memory_space<vmem>>, vector<128x128xbf16>
    %cst_19 = arith.constant dense<0.000000e+00> : vector<16x128xf32>
    %41 = tpu.matmul %39, %40, %cst_19 {dimension_numbers = #tpu.dot_dimension_numbers<[1], [0], [0], [1], [0, 0, 1, 1], [], []>} : vector<16x128xbf16>, vector<128x128xbf16>, vector<16x128xf32> -> vector<16x128xf32>
    %c0_20 = arith.constant 0 : index
    %c0_21 = arith.constant 0 : index
    %42 = vector.load %arg7[%c0_20, %c0_21] : memref<1x128xf32, #tpu.memory_space<vmem>>, vector<1x128xf32>
    %43 = vector.broadcast %42 : vector<1x128xf32> to vector<16x128xf32>
    %44 = arith.addf %41, %43 : vector<16x128xf32>
    %c0_22 = arith.constant 0 : index
    %c0_23 = arith.constant 0 : index
    %45 = vector.load %arg8[%c0_22, %c0_23] : memref<16x128xf32, #tpu.memory_space<vmem>>, vector<16x128xf32>
    tpu.vector_store %arg8[%c0_22, %c0_23], %44 {strides = array<i32>} : memref<16x128xf32, #tpu.memory_space<vmem>>, vector<16x128xf32>,
    return
  }
  func.func @transform_0(%arg0: i32) -> (i32, i32) {
    %c0_i32 = arith.constant 0 : i32
    %c0_i32_0 = arith.constant 0 : i32
    return %arg0, %c0_i32 : i32, i32
  }
  func.func @transform_1(%arg0: i32) -> (i32, i32) {
    %c0_i32 = arith.constant 0 : i32
    %c0_i32_0 = arith.constant 0 : i32
    %c0_i32_1 = arith.constant 0 : i32
    return %c0_i32, %c0_i32_0 : i32, i32
  }
  func.func @transform_2(%arg0: i32) -> (i32, i32) {
    %c0_i32 = arith.constant 0 : i32
    %c0_i32_0 = arith.constant 0 : i32
    %c0_i32_1 = arith.constant 0 : i32
    return %c0_i32, %c0_i32_0 : i32, i32
  }
  func.func @transform_3(%arg0: i32) -> (i32, i32) {
    %c0_i32 = arith.constant 0 : i32
    %c0_i32_0 = arith.constant 0 : i32
    %c0_i32_1 = arith.constant 0 : i32
    return %c0_i32, %c0_i32_0 : i32, i32
  }
  func.func @transform_4(%arg0: i32) -> (i32, i32) {
    %c0_i32 = arith.constant 0 : i32
    %c0_i32_0 = arith.constant 0 : i32
    %c0_i32_1 = arith.constant 0 : i32
    return %c0_i32, %c0_i32_0 : i32, i32
  }
  func.func @transform_5(%arg0: i32) -> (i32, i32) {
    %c0_i32 = arith.constant 0 : i32
    %c0_i32_0 = arith.constant 0 : i32
    %c0_i32_1 = arith.constant 0 : i32
    return %c0_i32, %c0_i32_0 : i32, i32
  }
  func.func @transform_6(%arg0: i32) -> (i32, i32) {
    %c0_i32 = arith.constant 0 : i32
    %c0_i32_0 = arith.constant 0 : i32
    %c0_i32_1 = arith.constant 0 : i32
    return %c0_i32, %c0_i32_0 : i32, i32
  }
  func.func @transform_7(%arg0: i32) -> (i32, i32) {
    %c0_i32 = arith.constant 0 : i32
    %c0_i32_0 = arith.constant 0 : i32
    return %arg0, %c0_i32 : i32, i32
  }
}

</mosaic_0001>

<llo_original>
// kernel: tpu_custom_call.1
$region0: #{tpu_custom_call.1}
  #allocation0 [shape = 'u32[]', space=smem, size = 0x4, offset = 0x4, fixed_abs, tag = 'smem constant byte address 0x4 - core index']
  #allocation1 [shape = 'u32[144,128]{1,0:T(1,128)}', space=vmem, size = 0x12000, scoped, tag = 'internal scratch']
  %s0 = inlined_call_operand.hbm [shape: f32[16,128], index: 0, kind: input, shape index: {}]
  %s1 = inlined_call_operand.hbm [shape: bf16[128,128], index: 1, kind: input, shape index: {}]
  %s2 = inlined_call_operand.vmem [shape: f32[1,128], index: 2, kind: input, shape index: {}]
  %s3 = inlined_call_operand.vmem [shape: f32[1,128], index: 3, kind: input, shape index: {}]
  %s4 = inlined_call_operand.vmem [shape: f32[1,128], index: 4, kind: input, shape index: {}]
  %s5 = inlined_call_operand.hbm [shape: bf16[128,128], index: 5, kind: input, shape index: {}]
  %s6 = inlined_call_operand.vmem [shape: f32[1,128], index: 6, kind: input, shape index: {}]
  %s7 = inlined_call_operand.hbm [shape: f32[16,128], index: 7, kind: output, shape index: {}]
  %s8 = sld [smem:[#allocation0]]
  $region50: #{tpu_custom_call.1} parent=0
    _
  %s10 = ssub.s32 1, %s8
  %s11 = scalar_select 0, %s10, %s8
  $region1: #{tpu_custom_call.1} parent=0
    #allocation2 [shape = 'u8[8192]{0}', space=vmem, size = 0x2000, scoped, tag = 'input window, operand 0, single buffered']
    #allocation3 [shape = 's32[1]{0}', space=sflag, size = 0x4, scoped, tag = 'scoped memory for tpu_custom_call.1']
    #allocation4 [shape = 's32[1]{0}', space=sflag, size = 0x4, scoped, tag = 'scoped memory for tpu_custom_call.1']
    #allocation5 [shape = 'u8[32768]{0}', space=vmem, size = 0x8000, scoped, tag = 'input window, operand 1, single buffered']
    #allocation6 [shape = 's32[1]{0}', space=sflag, size = 0x4, scoped, tag = 'scoped memory for tpu_custom_call.1']
    #allocation7 [shape = 'u8[32768]{0}', space=vmem, size = 0x8000, scoped, tag = 'input window, operand 5, single buffered']
    #allocation8 [shape = 'u8[8192]{0}', space=vmem, size = 0x2000, scoped, tag = 'output window, operand 0, single buffered']
    %12 = vsyncpa [#allocation3], 0
    %13 = vsyncpa [#allocation6], 0
    %14 = vsyncpa [#allocation4], 0
    // Predicated region
    $region2: #{tpu_custom_call.1} parent=1 // pred_check
      _
    $region3: #{tpu_custom_call.1} parent=1 // pred_check_branch
      %16 = sbr.rel (0) target = $region5
    $region4: #{tpu_custom_call.1} parent=1 // pred_region
      %s18 = ssub.s32 256, 256
      %19 = vsyncadd [#allocation3], %s18
      %s20 = sshll.u32 [#allocation2], 4
      %s21 = int_to_ptr.vmem [resolvable:$true] %s20
      %26 = dma.hbm_to_vmem [thread:$0]  %s0, 256, %s21, [#allocation3], 128, 128, 8
    $region5: #{tpu_custom_call.1} parent=1 // pred_fallthru
      _
    // Predicated region
    $region6: #{tpu_custom_call.1} parent=1 // pred_check
      _
    $region7: #{tpu_custom_call.1} parent=1 // pred_check_branch
      %28 = sbr.rel (0) target = $region9
    $region8: #{tpu_custom_call.1} parent=1 // pred_region
      %s30 = ssub.s32 1024, 1024
      %31 = vsyncadd [#allocation6], %s30
      %s32 = sshll.u32 [#allocation5], 4
      %s33 = int_to_ptr.vmem [resolvable:$true] %s32
      %38 = dma.hbm_to_vmem [thread:$0]  %s1, 1024, %s33, [#allocation6], 64, 64, 4
    $region9: #{tpu_custom_call.1} parent=1 // pred_fallthru
      _
    // Predicated region
    $region10: #{tpu_custom_call.1} parent=1 // pred_check
      _
    $region11: #{tpu_custom_call.1} parent=1 // pred_check_branch
      %40 = sbr.rel (0) target = $region13
    $region12: #{tpu_custom_call.1} parent=1 // pred_region
      _
    $region13: #{tpu_custom_call.1} parent=1 // pred_fallthru
      _
    // Predicated region
    $region14: #{tpu_custom_call.1} parent=1 // pred_check
      _
    $region15: #{tpu_custom_call.1} parent=1 // pred_check_branch
      %42 = sbr.rel (0) target = $region17
    $region16: #{tpu_custom_call.1} parent=1 // pred_region
      _
    $region17: #{tpu_custom_call.1} parent=1 // pred_fallthru
      _
    // Predicated region
    $region18: #{tpu_custom_call.1} parent=1 // pred_check
      _
    $region19: #{tpu_custom_call.1} parent=1 // pred_check_branch
      %44 = sbr.rel (0) target = $region21
    $region20: #{tpu_custom_call.1} parent=1 // pred_region
      _
    $region21: #{tpu_custom_call.1} parent=1 // pred_fallthru
      _
    // Predicated region
    $region22: #{tpu_custom_call.1} parent=1 // pred_check
      _
    $region23: #{tpu_custom_call.1} parent=1 // pred_check_branch
      %46 = sbr.rel (0) target = $region25
    $region24: #{tpu_custom_call.1} parent=1 // pred_region
      %s48 = ssub.s32 1024, 1024
      %49 = vsyncadd [#allocation6], %s48
      %s50 = sshll.u32 [#allocation7], 4
      %s51 = int_to_ptr.vmem [resolvable:$true] %s50
      %56 = dma.hbm_to_vmem [thread:$0]  %s5, 1024, %s51, [#allocation6], 64, 64, 4
    $region25: #{tpu_custom_call.1} parent=1 // pred_fallthru
      _
    // Predicated region
    $region26: #{tpu_custom_call.1} parent=1 // pred_check
      _
    $region27: #{tpu_custom_call.1} parent=1 // pred_check_branch
      %58 = sbr.rel (0) target = $region29
    $region28: #{tpu_custom_call.1} parent=1 // pred_region
      _
    $region29: #{tpu_custom_call.1} parent=1 // pred_fallthru
      _
    // Predicated region
    $region30: #{tpu_custom_call.1} parent=1 // pred_check
      _
    $region31: #{tpu_custom_call.1} parent=1 // pred_check_branch
      %60 = sbr.rel (0) target = $region33
    $region32: #{tpu_custom_call.1} parent=1 // pred_region
      %61 = dma.done [#allocation3], 256
    $region33: #{tpu_custom_call.1} parent=1 // pred_fallthru
      _
    // Predicated region
    $region34: #{tpu_custom_call.1} parent=1 // pred_check
      _
    $region35: #{tpu_custom_call.1} parent=1 // pred_check_branch
      %63 = sbr.rel (0) target = $region37
    $region36: #{tpu_custom_call.1} parent=1 // pred_region
      %64 = dma.done [#allocation6], 1024
    $region37: #{tpu_custom_call.1} parent=1 // pred_fallthru
      _
    // Predicated region
    $region38: #{tpu_custom_call.1} parent=1 // pred_check
      _
    $region39: #{tpu_custom_call.1} parent=1 // pred_check_branch
      %66 = sbr.rel (0) target = $region41
    $region40: #{tpu_custom_call.1} parent=1 // pred_region
      %67 = dma.done [#allocation6], 1024
    $region41: #{tpu_custom_call.1} parent=1 // pred_fallthru
      _
    %v69 = vld [vmem:[#allocation2] sm:$0xff]
    %v70 = vld [vmem:[#allocation2 + $0x8] sm:$0xff]
    %v71 = vpack.c.bf16 %v70, %v69
    %v72 = vld [vmem:[#allocation5] sm:$0xf]
    %v73 = vld [vmem:[#allocation5 + $0x4] sm:$0xf]
    %v74 = vld [vmem:[#allocation5 + $0x8] sm:$0xf]
    %v75 = vld [vmem:[#allocation5 + $0xc] sm:$0xf]
    %v76 = vld [vmem:[#allocation5 + $0x10] sm:$0xf]
    %v77 = vld [vmem:[#allocation5 + $0x14] sm:$0xf]
    %v78 = vld [vmem:[#allocation5 + $0x18] sm:$0xf]
    %v79 = vld [vmem:[#allocation5 + $0x1c] sm:$0xf]
    %v80 = vld [vmem:[#allocation5 + $0x20] sm:$0xf]
    %v81 = vld [vmem:[#allocation5 + $0x24] sm:$0xf]
    %v82 = vld [vmem:[#allocation5 + $0x28] sm:$0xf]
    %v83 = vld [vmem:[#allocation5 + $0x2c] sm:$0xf]
    %v84 = vld [vmem:[#allocation5 + $0x30] sm:$0xf]
    %v85 = vld [vmem:[#allocation5 + $0x34] sm:$0xf]
    %v86 = vld [vmem:[#allocation5 + $0x38] sm:$0xf]
    %v87 = vld [vmem:[#allocation5 + $0x3c] sm:$0xf]
    %v88 = vld [vmem:[%s2] sm:$0x1]
    %v90 = vlaneseq
    %v91 = vshrl.u32 %v90, 7
    %v92 = vsub.s32 0, %v91
    %v93 = vrot.slane %v88, %v92
    %v111 = vunpack.c.l.b16 %v72
    %v112 = vunpack.c.l.b16 %v73
    %v113 = vunpack.c.l.b16 %v74
    %v114 = vunpack.c.l.b16 %v75
    %v115 = vunpack.c.l.b16 %v76
    %v116 = vunpack.c.l.b16 %v77
    %v117 = vunpack.c.l.b16 %v78
    %v118 = vunpack.c.l.b16 %v79
    %v119 = vunpack.c.l.b16 %v80
    %v120 = vunpack.c.l.b16 %v81
    %v121 = vunpack.c.l.b16 %v82
    %v122 = vunpack.c.l.b16 %v83
    %v123 = vunpack.c.l.b16 %v84
    %v124 = vunpack.c.l.b16 %v85
    %v125 = vunpack.c.l.b16 %v86
    %v126 = vunpack.c.l.b16 %v87
    %v127 = vpack.c.b16 %v112, %v111
    %v128 = vpack.c.b16 %v114, %v113
    %v129 = vpack.c.b16 %v116, %v115
    %v130 = vpack.c.b16 %v118, %v117
    %v131 = vpack.c.b16 %v120, %v119
    %v132 = vpack.c.b16 %v122, %v121
    %v133 = vpack.c.b16 %v124, %v123
    %v134 = vpack.c.b16 %v126, %v125
    %143 = vmatprep.subr.bf16.mxu0 0
    %144 = vmatpush1.bf16.msra.mxu0 %v127
    %145 = vmatprep.subr.bf16.mxu0 0
    %146 = vmatpush1.bf16.msra.mxu0 %v128
    %147 = vmatprep.subr.bf16.mxu0 0
    %148 = vmatpush1.bf16.msra.mxu0 %v129
    %149 = vmatprep.subr.bf16.mxu0 0
    %150 = vmatpush1.bf16.msra.mxu0 %v130
    %151 = vmatprep.subr.bf16.mxu0 0
    %152 = vmatpush1.bf16.msra.mxu0 %v131
    %153 = vmatprep.subr.bf16.mxu0 0
    %154 = vmatpush1.bf16.msra.mxu0 %v132
    %155 = vmatprep.subr.bf16.mxu0 0
    %156 = vmatpush1.bf16.msra.mxu0 %v133
    %157 = vmatprep.subr.bf16.mxu0 0
    %158 = vmatpush1.bf16.msra.mxu0 %v134
    %159 = vmatprep.subr.bf16.mxu0 0
    %160 = vmatpush1.bf16.msra.mxu0 0
    %161 = vmatprep.subr.bf16.mxu0 0
    %162 = vmatpush1.bf16.msra.mxu0 0
    %163 = vmatprep.subr.bf16.mxu0 0
    %164 = vmatpush1.bf16.msra.mxu0 0
    %165 = vmatprep.subr.bf16.mxu0 0
    %166 = vmatpush1.bf16.msra.mxu0 0
    %167 = vmatprep.subr.bf16.mxu0 0
    %168 = vmatpush1.bf16.msra.mxu0 0
    %169 = vmatprep.subr.bf16.mxu0 0
    %170 = vmatpush1.bf16.msra.mxu0 0
    %171 = vmatprep.subr.bf16.mxu0 0
    %172 = vmatpush1.bf16.msra.mxu0 0
    %173 = vmatprep.subr.bf16.mxu0 0
    %174 = vmatpush1.bf16.msra.mxu0 0
    %175 = vmatprep.mubr.bf16.mxu0 0
    %176 = vmatmul.mubr.bf16.gmra.mrb[0].mxu0 %v71
    %v177 = vpop.f32.mrb[0].mxu0
    %v178 = vadd.f32 %v93, %v177
    %v179 = vpop.f32.mrb[0].mxu0
    %v180 = vpop.f32.mrb[0].mxu0
    %v181 = vadd.f32 %v93, %v180
    %v182 = vpop.f32.mrb[0].mxu0
    %183 = vdwg.mxu0
    %v184 = vmul.f32 %v178, 0.5
    %v185 = vmul.f32 %v181, 0.5
    %v186 = vmul.f32 %v178, 0.70710677
    %v187 = vmul.f32 %v181, 0.70710677
    %v188 = verf.f32.pop %v186
    %v189 = verf.f32.pop %v187
    %v190 = vadd.f32 %v188, 1.0
    %v191 = vadd.f32 %v189, 1.0
    %v192 = vmul.f32 %v184, %v190
    %v193 = vmul.f32 %v185, %v191
    %194 = vadd.xlane.f32.xlu0 %v192
    %v195 = vpop.xlane.xlu0 %194
    %196 = vadd.xlane.f32.xlu0 %v193
    %v197 = vpop.xlane.xlu0 %196
    %v198 = vmul.f32 %v192, %v192
    %v199 = vmul.f32 %v193, %v193
    %200 = vadd.xlane.f32.xlu0 %v198
    %v201 = vpop.xlane.xlu0 %200
    %202 = vadd.xlane.f32.xlu0 %v199
    %v203 = vpop.xlane.xlu0 %202
    %v204 = vmul.f32 %v195, 0.0078125
    %v205 = vmul.f32 %v197, 0.0078125
    %v206 = vmul.f32 %v201, 0.0078125
    %v207 = vmul.f32 %v203, 0.0078125
    %v208 = vmul.f32 %v204, %v204
    %v209 = vmul.f32 %v205, %v205
    %v210 = vsub.f32 %v206, %v208
    %v211 = vsub.f32 %v207, %v209
    %v212 = vsub.f32 %v192, %v204
    %v213 = vsub.f32 %v193, %v205
    %v214 = vadd.f32 %v210, 1e-05
    %v215 = vadd.f32 %v211, 1e-05
    %v216 = vrsqrt.pop %v214
    %v217 = vrsqrt.pop %v215
    %v218 = vmul.f32 %v212, %v216
    %v219 = vmul.f32 %v213, %v217
    %v220 = vld [vmem:[%s3] sm:$0x1]
    %v222 = vlaneseq
    %v223 = vshrl.u32 %v222, 7
    %v224 = vsub.s32 0, %v223
    %v225 = vrot.slane %v220, %v224
    %v227 = vmul.f32 %v218, %v225
    %v228 = vmul.f32 %v219, %v225
    %v229 = vld [vmem:[%s4] sm:$0x1]
    %v231 = vlaneseq
    %v232 = vshrl.u32 %v231, 7
    %v233 = vsub.s32 0, %v232
    %v234 = vrot.slane %v229, %v233
    %v236 = vadd.f32 %v227, %v234
    %v237 = vadd.f32 %v228, %v234
    %v238 = vpack.c.bf16 %v237, %v236
    %v239 = vld [vmem:[#allocation7] sm:$0xf]
    %v240 = vld [vmem:[#allocation7 + $0x4] sm:$0xf]
    %v241 = vld [vmem:[#allocation7 + $0x8] sm:$0xf]
    %v242 = vld [vmem:[#allocation7 + $0xc] sm:$0xf]
    %v243 = vld [vmem:[#allocation7 + $0x10] sm:$0xf]
    %v244 = vld [vmem:[#allocation7 + $0x14] sm:$0xf]
    %v245 = vld [vmem:[#allocation7 + $0x18] sm:$0xf]
    %v246 = vld [vmem:[#allocation7 + $0x1c] sm:$0xf]
    %v247 = vld [vmem:[#allocation7 + $0x20] sm:$0xf]
    %v248 = vld [vmem:[#allocation7 + $0x24] sm:$0xf]
    %v249 = vld [vmem:[#allocation7 + $0x28] sm:$0xf]
    %v250 = vld [vmem:[#allocation7 + $0x2c] sm:$0xf]
    %v251 = vld [vmem:[#allocation7 + $0x30] sm:$0xf]
    %v252 = vld [vmem:[#allocation7 + $0x34] sm:$0xf]
    %v253 = vld [vmem:[#allocation7 + $0x38] sm:$0xf]
    %v254 = vld [vmem:[#allocation7 + $0x3c] sm:$0xf]
    %v255 = vld [vmem:[%s6] sm:$0x1]
    %v257 = vlaneseq
    %v258 = vshrl.u32 %v257, 7
    %v259 = vsub.s32 0, %v258
    %v260 = vrot.slane %v255, %v259
    %v278 = vunpack.c.l.b16 %v239
    %v279 = vunpack.c.l.b16 %v240
    %v280 = vunpack.c.l.b16 %v241
    %v281 = vunpack.c.l.b16 %v242
    %v282 = vunpack.c.l.b16 %v243
    %v283 = vunpack.c.l.b16 %v244
    %v284 = vunpack.c.l.b16 %v245
    %v285 = vunpack.c.l.b16 %v246
    %v286 = vunpack.c.l.b16 %v247
    %v287 = vunpack.c.l.b16 %v248
    %v288 = vunpack.c.l.b16 %v249
    %v289 = vunpack.c.l.b16 %v250
    %v290 = vunpack.c.l.b16 %v251
    %v291 = vunpack.c.l.b16 %v252
    %v292 = vunpack.c.l.b16 %v253
    %v293 = vunpack.c.l.b16 %v254
    %v294 = vpack.c.b16 %v279, %v278
    %v295 = vpack.c.b16 %v281, %v280
    %v296 = vpack.c.b16 %v283, %v282
    %v297 = vpack.c.b16 %v285, %v284
    %v298 = vpack.c.b16 %v287, %v286
    %v299 = vpack.c.b16 %v289, %v288
    %v300 = vpack.c.b16 %v291, %v290
    %v301 = vpack.c.b16 %v293, %v292
    %310 = vmatprep.subr.bf16.mxu0 0
    %311 = vmatpush1.bf16.msra.mxu0 %v294
    %312 = vmatprep.subr.bf16.mxu0 0
    %313 = vmatpush1.bf16.msra.mxu0 %v295
    %314 = vmatprep.subr.bf16.mxu0 0
    %315 = vmatpush1.bf16.msra.mxu0 %v296
    %316 = vmatprep.subr.bf16.mxu0 0
    %317 = vmatpush1.bf16.msra.mxu0 %v297
    %318 = vmatprep.subr.bf16.mxu0 0
    %319 = vmatpush1.bf16.msra.mxu0 %v298
    %320 = vmatprep.subr.bf16.mxu0 0
    %321 = vmatpush1.bf16.msra.mxu0 %v299
    %322 = vmatprep.subr.bf16.mxu0 0
    %323 = vmatpush1.bf16.msra.mxu0 %v300
    %324 = vmatprep.subr.bf16.mxu0 0
    %325 = vmatpush1.bf16.msra.mxu0 %v301
    %326 = vmatprep.subr.bf16.mxu0 0
    %327 = vmatpush1.bf16.msra.mxu0 0
    %328 = vmatprep.subr.bf16.mxu0 0
    %329 = vmatpush1.bf16.msra.mxu0 0
    %330 = vmatprep.subr.bf16.mxu0 0
    %331 = vmatpush1.bf16.msra.mxu0 0
    %332 = vmatprep.subr.bf16.mxu0 0
    %333 = vmatpush1.bf16.msra.mxu0 0
    %334 = vmatprep.subr.bf16.mxu0 0
    %335 = vmatpush1.bf16.msra.mxu0 0
    %336 = vmatprep.subr.bf16.mxu0 0
    %337 = vmatpush1.bf16.msra.mxu0 0
    %338 = vmatprep.subr.bf16.mxu0 0
    %339 = vmatpush1.bf16.msra.mxu0 0
    %340 = vmatprep.subr.bf16.mxu0 0
    %341 = vmatpush1.bf16.msra.mxu0 0
    %342 = vmatprep.mubr.bf16.mxu0 0
    %343 = vmatmul.mubr.bf16.gmra.mrb[0].mxu0 %v238
    %v344 = vpop.f32.mrb[0].mxu0
    %v345 = vadd.f32 %v260, %v344
    %v346 = vpop.f32.mrb[0].mxu0
    %v347 = vpop.f32.mrb[0].mxu0
    %v348 = vadd.f32 %v260, %v347
    %v349 = vpop.f32.mrb[0].mxu0
    %350 = vdwg.mxu0
    %351 = vst [vmem:[#allocation8] sm:$0xff] %v345
    %352 = vst [vmem:[#allocation8 + $0x8] sm:$0xff] %v348
    // Predicated region
    $region42: #{tpu_custom_call.1} parent=1 // pred_check
      _
    $region43: #{tpu_custom_call.1} parent=1 // pred_check_branch
      %354 = sbr.rel (0) target = $region45
    $region44: #{tpu_custom_call.1} parent=1 // pred_region
      %s356 = ssub.s32 256, 256
      %357 = vsyncadd [#allocation4], %s356
      %s358 = sshll.u32 [#allocation8], 4
      %s359 = int_to_ptr.vmem [resolvable:$true] %s358
      %364 = dma.vmem_to_hbm [thread:$0]  %s359, 256, %s7, [#allocation4], 128, 128, 8
    $region45: #{tpu_custom_call.1} parent=1 // pred_fallthru
      _
    // Predicated region
    $region46: #{tpu_custom_call.1} parent=1 // pred_check
      _
    $region47: #{tpu_custom_call.1} parent=1 // pred_check_branch
      %366 = sbr.rel (0) target = $region49
    $region48: #{tpu_custom_call.1} parent=1 // pred_region
      %367 = dma.done [#allocation4], 256
    $region49: #{tpu_custom_call.1} parent=1 // pred_fallthru
      _
    %368 = vsyncpa [#allocation3], 1
    %369 = vsyncpa [#allocation6], 1
    %370 = vsyncpa [#allocation4], 1

</llo_original>
